<compile_context>
chip_gen: v7x
topology: tpu7x:2x2x1
jax: 0.10.0
libtpu: 0.0.40
codegen_flags: <defaults>
</compile_context>

<pallas_src>
import numpy as np
import jax
import jax.numpy as jnp
from jax import lax
from jax.experimental import pallas as pl
from jax.experimental.pallas import tpu as pltpu


_EPS = 1e-9            # torch.nn.CosineSimilarity eps
_EPS_SQ = _EPS * _EPS  # clamp on the product of squared norms (== eps on the norm product)

# Whole-x-in-VMEM path is used when the f32 copy of x stays well under the
# smallest default scoped-VMEM budget (v5e: 16 MiB; v7x scoped default 32 MiB),
# leaving headroom for intermediates and the output.
_SMALL_X_BYTES = 4 << 20
# Also cap the static unroll so the kernel body stays small for big batches.
_MAX_UNROLL_PAIRS = 512


def get_concat_index(class_num):
    """Same as ContrastiveLoss.getConcatIndex (pairs i<j over the batch)."""
    res = [[], []]
    for index in range(class_num - 1):
        res[0] += [index for _ in range(class_num - index - 1)]
        res[1] += [i for i in range(index + 1, class_num)]
    return res


def _make_all_pairs_kernel(idx0, idx1):
    """Single-invocation kernel: x fully resident in VMEM, pairs unrolled."""
    idx0 = tuple(int(i) for i in idx0)
    idx1 = tuple(int(i) for i in idx1)

    def kernel(x_ref, o_ref):
        x = x_ref[...].astype(jnp.float32)           # (B, C, D)
        sq = jnp.sum(x * x, axis=-1)                 # (B, C) squared norms, once per row
        rows = []
        for i, j in zip(idx0, idx1):                 # static unroll over pairs
            dot = jnp.sum(x[i] * x[j], axis=-1)      # (C,)
            inv = lax.rsqrt(jnp.maximum(sq[i] * sq[j], _EPS_SQ))  # EUP, ~free
            rows.append(dot * inv)
        # One full-array store of the (P, C) result (no per-pair partial stores).
        o_ref[...] = jnp.stack(rows, axis=0).astype(o_ref.dtype)

    return kernel


def _pair_cosine_kernel(idx0_ref, idx1_ref, a_ref, b_ref, o_ref):
    """Fallback: one (i, j) pair per grid step; rows of x are DMA'd directly via
    the scalar-prefetched index maps (idx0/idx1 live in SMEM)."""
    del idx0_ref, idx1_ref                           # consumed by the index_maps
    a = a_ref[...].astype(jnp.float32)               # (1, C, D)
    b = b_ref[...].astype(jnp.float32)               # (1, C, D)
    dot = jnp.sum(a * b, axis=-1)                    # (1, C)
    na2 = jnp.sum(a * a, axis=-1)
    nb2 = jnp.sum(b * b, axis=-1)
    inv = lax.rsqrt(jnp.maximum(na2 * nb2, _EPS_SQ))
    o_ref[...] = (dot * inv).astype(o_ref.dtype)


def contrastive_loss_forward(x, target, batch_size, *, force_tiled=False):
    """Pallas implementation of ContrastiveLoss(batchSize).forward(x, target)
    with reduce=None: returns `distance` of shape (numPairs, classNum).

    `target` is accepted for API parity; with reduce=None the reference module
    returns `distance` untouched by the mask tensors, so it is unused here."""
    del target
    B, C, D = x.shape
    assert B == batch_size, "leading dim of x must equal batchSize"
    idx0, idx1 = get_concat_index(batch_size)
    P = len(idx0)

    small = (B * C * D * 4 <= _SMALL_X_BYTES) and (P <= _MAX_UNROLL_PAIRS)
    if not force_tiled and small:
        # --- small-x path: single invocation, whole x resident in VMEM ---
        return pl.pallas_call(
            _make_all_pairs_kernel(idx0, idx1),
            out_shape=jax.ShapeDtypeStruct((P, C), jnp.float32),
            in_specs=[pl.BlockSpec(memory_space=pltpu.MemorySpace.VMEM)],
            out_specs=pl.BlockSpec(memory_space=pltpu.MemorySpace.VMEM),
        )(x)

    # --- large-x fallback: grid over pairs, scalar-prefetched row indices ---
    idx0 = jnp.asarray(idx0, dtype=jnp.int32)
    idx1 = jnp.asarray(idx1, dtype=jnp.int32)
    return pl.pallas_call(
        _pair_cosine_kernel,
        out_shape=jax.ShapeDtypeStruct((P, C), jnp.float32),
        grid_spec=pltpu.PrefetchScalarGridSpec(
            num_scalar_prefetch=2,
            grid=(P,),
            in_specs=[
                pl.BlockSpec((1, C, D), lambda p, i0, i1: (i0[p], 0, 0)),
                pl.BlockSpec((1, C, D), lambda p, i0, i1: (i1[p], 0, 0)),
            ],
            out_specs=pl.BlockSpec((1, C), lambda p, i0, i1: (p, 0)),
        ),
        compiler_params=pltpu.CompilerParams(
            dimension_semantics=("arbitrary",)),
    )(idx0, idx1, x, x)   # x passed twice: two DMA streams, no gather in HBM


def _reference(x, batch_size):
    """Pure-JAX reference of the reduce=None path (torch eps semantics)."""
    idx0, idx1 = get_concat_index(batch_size)
    a = x[np.asarray(idx0)]
    b = x[np.asarray(idx1)]
    dot = jnp.sum(a * b, axis=-1)
    na = jnp.sqrt(jnp.sum(a * a, axis=-1))
    nb = jnp.sqrt(jnp.sum(b * b, axis=-1))
    return dot / jnp.maximum(na * nb, _EPS)


if __name__ == "__main__":
    batch_size = 4      # BatchSize
    class_num = 8       # classNum
    feature_dim = 32    # featureDim

    key = jax.random.PRNGKey(0)
    k1, k2 = jax.random.split(key)
    x = jax.random.normal(k1, (batch_size, class_num, feature_dim),
                          dtype=jnp.float32)
    # target in {-1, 0, 1} (unused by the reduce=None path, kept for API parity)
    target = jax.random.randint(k2, (batch_size, class_num), -1, 2).astype(
        jnp.float32)

    ref = np.asarray(_reference(x, batch_size))

    # Primary path: whole x resident in VMEM, single invocation, no gather.
    dist = jax.block_until_ready(contrastive_loss_forward(x, target, batch_size))
    np.testing.assert_allclose(np.asarray(dist), ref, rtol=1e-5, atol=1e-5)

    # Large-x fallback path (scalar-prefetched row DMA), exercised here too.
    dist_tiled = jax.block_until_ready(
        contrastive_loss_forward(x, target, batch_size, force_tiled=True))
    np.testing.assert_allclose(np.asarray(dist_tiled), ref, rtol=1e-5, atol=1e-5)

    print("KERNEL_OK")
</pallas_src>

<mosaic_0001>
module attributes {stable_mosaic.version = 11 : i64} {
  func.func @kernel(%arg0: memref<4x8x32xf32, #tpu.memory_space<vmem>>, %arg1: memref<6x8xf32, #tpu.memory_space<vmem>>) attributes {dimension_semantics = [], scalar_prefetch = 0 : i64, scratch_operands = 0 : i64, tpu.core_type = #tpu.core_type<tc>} {
    %c0 = arith.constant 0 : index
    %c0_0 = arith.constant 0 : index
    %c0_1 = arith.constant 0 : index
    %0 = vector.load %arg0[%c0, %c0_0, %c0_1] : memref<4x8x32xf32, #tpu.memory_space<vmem>>, vector<4x8x32xf32>
    %1 = arith.mulf %0, %0 : vector<4x8x32xf32>
    %cst = arith.constant dense<0.000000e+00> : vector<4x8xf32>
    %2 = vector.multi_reduction <add>, %1, %cst [2] : vector<4x8x32xf32> to vector<4x8xf32>
    %3 = vector.extract_strided_slice %0 {offsets = [0, 0, 0], sizes = [1, 8, 32], strides = [1, 1, 1]} : vector<4x8x32xf32> to vector<1x8x32xf32>
    %4 = vector.shape_cast %3 : vector<1x8x32xf32> to vector<8x32xf32>
    %5 = vector.extract_strided_slice %0 {offsets = [1, 0, 0], sizes = [1, 8, 32], strides = [1, 1, 1]} : vector<4x8x32xf32> to vector<1x8x32xf32>
    %6 = vector.shape_cast %5 : vector<1x8x32xf32> to vector<8x32xf32>
    %7 = arith.mulf %4, %6 : vector<8x32xf32>
    %cst_2 = arith.constant dense<0.000000e+00> : vector<8xf32>
    %8 = vector.multi_reduction <add>, %7, %cst_2 [1] : vector<8x32xf32> to vector<8xf32>
    %9 = vector.extract_strided_slice %2 {offsets = [0, 0], sizes = [1, 8], strides = [1, 1]} : vector<4x8xf32> to vector<1x8xf32>
    %10 = vector.shape_cast %9 : vector<1x8xf32> to vector<8xf32>
    %11 = vector.extract_strided_slice %2 {offsets = [1, 0], sizes = [1, 8], strides = [1, 1]} : vector<4x8xf32> to vector<1x8xf32>
    %12 = vector.shape_cast %11 : vector<1x8xf32> to vector<8xf32>
    %13 = arith.mulf %10, %12 : vector<8xf32>
    %cst_3 = arith.constant 1.000000e-18 : f32
    %14 = vector.broadcast %cst_3 : f32 to vector<8xf32>
    %15 = arith.maximumf %13, %14 : vector<8xf32>
    %16 = math.rsqrt %15 : vector<8xf32>
    %17 = arith.mulf %8, %16 : vector<8xf32>
    %18 = vector.extract_strided_slice %0 {offsets = [0, 0, 0], sizes = [1, 8, 32], strides = [1, 1, 1]} : vector<4x8x32xf32> to vector<1x8x32xf32>
    %19 = vector.shape_cast %18 : vector<1x8x32xf32> to vector<8x32xf32>
    %20 = vector.extract_strided_slice %0 {offsets = [2, 0, 0], sizes = [1, 8, 32], strides = [1, 1, 1]} : vector<4x8x32xf32> to vector<1x8x32xf32>
    %21 = vector.shape_cast %20 : vector<1x8x32xf32> to vector<8x32xf32>
    %22 = arith.mulf %19, %21 : vector<8x32xf32>
    %cst_4 = arith.constant dense<0.000000e+00> : vector<8xf32>
    %23 = vector.multi_reduction <add>, %22, %cst_4 [1] : vector<8x32xf32> to vector<8xf32>
    %24 = vector.extract_strided_slice %2 {offsets = [0, 0], sizes = [1, 8], strides = [1, 1]} : vector<4x8xf32> to vector<1x8xf32>
    %25 = vector.shape_cast %24 : vector<1x8xf32> to vector<8xf32>
    %26 = vector.extract_strided_slice %2 {offsets = [2, 0], sizes = [1, 8], strides = [1, 1]} : vector<4x8xf32> to vector<1x8xf32>
    %27 = vector.shape_cast %26 : vector<1x8xf32> to vector<8xf32>
    %28 = arith.mulf %25, %27 : vector<8xf32>
    %cst_5 = arith.constant 1.000000e-18 : f32
    %29 = vector.broadcast %cst_5 : f32 to vector<8xf32>
    %30 = arith.maximumf %28, %29 : vector<8xf32>
    %31 = math.rsqrt %30 : vector<8xf32>
    %32 = arith.mulf %23, %31 : vector<8xf32>
    %33 = vector.extract_strided_slice %0 {offsets = [0, 0, 0], sizes = [1, 8, 32], strides = [1, 1, 1]} : vector<4x8x32xf32> to vector<1x8x32xf32>
    %34 = vector.shape_cast %33 : vector<1x8x32xf32> to vector<8x32xf32>
    %35 = vector.extract_strided_slice %0 {offsets = [3, 0, 0], sizes = [1, 8, 32], strides = [1, 1, 1]} : vector<4x8x32xf32> to vector<1x8x32xf32>
    %36 = vector.shape_cast %35 : vector<1x8x32xf32> to vector<8x32xf32>
    %37 = arith.mulf %34, %36 : vector<8x32xf32>
    %cst_6 = arith.constant dense<0.000000e+00> : vector<8xf32>
    %38 = vector.multi_reduction <add>, %37, %cst_6 [1] : vector<8x32xf32> to vector<8xf32>
    %39 = vector.extract_strided_slice %2 {offsets = [0, 0], sizes = [1, 8], strides = [1, 1]} : vector<4x8xf32> to vector<1x8xf32>
    %40 = vector.shape_cast %39 : vector<1x8xf32> to vector<8xf32>
    %41 = vector.extract_strided_slice %2 {offsets = [3, 0], sizes = [1, 8], strides = [1, 1]} : vector<4x8xf32> to vector<1x8xf32>
    %42 = vector.shape_cast %41 : vector<1x8xf32> to vector<8xf32>
    %43 = arith.mulf %40, %42 : vector<8xf32>
    %cst_7 = arith.constant 1.000000e-18 : f32
    %44 = vector.broadcast %cst_7 : f32 to vector<8xf32>
    %45 = arith.maximumf %43, %44 : vector<8xf32>
    %46 = math.rsqrt %45 : vector<8xf32>
    %47 = arith.mulf %38, %46 : vector<8xf32>
    %48 = vector.extract_strided_slice %0 {offsets = [1, 0, 0], sizes = [1, 8, 32], strides = [1, 1, 1]} : vector<4x8x32xf32> to vector<1x8x32xf32>
    %49 = vector.shape_cast %48 : vector<1x8x32xf32> to vector<8x32xf32>
    %50 = vector.extract_strided_slice %0 {offsets = [2, 0, 0], sizes = [1, 8, 32], strides = [1, 1, 1]} : vector<4x8x32xf32> to vector<1x8x32xf32>
    %51 = vector.shape_cast %50 : vector<1x8x32xf32> to vector<8x32xf32>
    %52 = arith.mulf %49, %51 : vector<8x32xf32>
    %cst_8 = arith.constant dense<0.000000e+00> : vector<8xf32>
    %53 = vector.multi_reduction <add>, %52, %cst_8 [1] : vector<8x32xf32> to vector<8xf32>
    %54 = vector.extract_strided_slice %2 {offsets = [1, 0], sizes = [1, 8], strides = [1, 1]} : vector<4x8xf32> to vector<1x8xf32>
    %55 = vector.shape_cast %54 : vector<1x8xf32> to vector<8xf32>
    %56 = vector.extract_strided_slice %2 {offsets = [2, 0], sizes = [1, 8], strides = [1, 1]} : vector<4x8xf32> to vector<1x8xf32>
    %57 = vector.shape_cast %56 : vector<1x8xf32> to vector<8xf32>
    %58 = arith.mulf %55, %57 : vector<8xf32>
    %cst_9 = arith.constant 1.000000e-18 : f32
    %59 = vector.broadcast %cst_9 : f32 to vector<8xf32>
    %60 = arith.maximumf %58, %59 : vector<8xf32>
    %61 = math.rsqrt %60 : vector<8xf32>
    %62 = arith.mulf %53, %61 : vector<8xf32>
    %63 = vector.extract_strided_slice %0 {offsets = [1, 0, 0], sizes = [1, 8, 32], strides = [1, 1, 1]} : vector<4x8x32xf32> to vector<1x8x32xf32>
    %64 = vector.shape_cast %63 : vector<1x8x32xf32> to vector<8x32xf32>
    %65 = vector.extract_strided_slice %0 {offsets = [3, 0, 0], sizes = [1, 8, 32], strides = [1, 1, 1]} : vector<4x8x32xf32> to vector<1x8x32xf32>
    %66 = vector.shape_cast %65 : vector<1x8x32xf32> to vector<8x32xf32>
    %67 = arith.mulf %64, %66 : vector<8x32xf32>
    %cst_10 = arith.constant dense<0.000000e+00> : vector<8xf32>
    %68 = vector.multi_reduction <add>, %67, %cst_10 [1] : vector<8x32xf32> to vector<8xf32>
    %69 = vector.extract_strided_slice %2 {offsets = [1, 0], sizes = [1, 8], strides = [1, 1]} : vector<4x8xf32> to vector<1x8xf32>
    %70 = vector.shape_cast %69 : vector<1x8xf32> to vector<8xf32>
    %71 = vector.extract_strided_slice %2 {offsets = [3, 0], sizes = [1, 8], strides = [1, 1]} : vector<4x8xf32> to vector<1x8xf32>
    %72 = vector.shape_cast %71 : vector<1x8xf32> to vector<8xf32>
    %73 = arith.mulf %70, %72 : vector<8xf32>
    %cst_11 = arith.constant 1.000000e-18 : f32
    %74 = vector.broadcast %cst_11 : f32 to vector<8xf32>
    %75 = arith.maximumf %73, %74 : vector<8xf32>
    %76 = math.rsqrt %75 : vector<8xf32>
    %77 = arith.mulf %68, %76 : vector<8xf32>
    %78 = vector.extract_strided_slice %0 {offsets = [2, 0, 0], sizes = [1, 8, 32], strides = [1, 1, 1]} : vector<4x8x32xf32> to vector<1x8x32xf32>
    %79 = vector.shape_cast %78 : vector<1x8x32xf32> to vector<8x32xf32>
    %80 = vector.extract_strided_slice %0 {offsets = [3, 0, 0], sizes = [1, 8, 32], strides = [1, 1, 1]} : vector<4x8x32xf32> to vector<1x8x32xf32>
    %81 = vector.shape_cast %80 : vector<1x8x32xf32> to vector<8x32xf32>
    %82 = arith.mulf %79, %81 : vector<8x32xf32>
    %cst_12 = arith.constant dense<0.000000e+00> : vector<8xf32>
    %83 = vector.multi_reduction <add>, %82, %cst_12 [1] : vector<8x32xf32> to vector<8xf32>
    %84 = vector.extract_strided_slice %2 {offsets = [2, 0], sizes = [1, 8], strides = [1, 1]} : vector<4x8xf32> to vector<1x8xf32>
    %85 = vector.shape_cast %84 : vector<1x8xf32> to vector<8xf32>
    %86 = vector.extract_strided_slice %2 {offsets = [3, 0], sizes = [1, 8], strides = [1, 1]} : vector<4x8xf32> to vector<1x8xf32>
    %87 = vector.shape_cast %86 : vector<1x8xf32> to vector<8xf32>
    %88 = arith.mulf %85, %87 : vector<8xf32>
    %cst_13 = arith.constant 1.000000e-18 : f32
    %89 = vector.broadcast %cst_13 : f32 to vector<8xf32>
    %90 = arith.maximumf %88, %89 : vector<8xf32>
    %91 = math.rsqrt %90 : vector<8xf32>
    %92 = arith.mulf %83, %91 : vector<8xf32>
    %93 = vector.shape_cast %17 : vector<8xf32> to vector<1x8xf32>
    %94 = vector.shape_cast %32 : vector<8xf32> to vector<1x8xf32>
    %95 = vector.shape_cast %47 : vector<8xf32> to vector<1x8xf32>
    %96 = vector.shape_cast %62 : vector<8xf32> to vector<1x8xf32>
    %97 = vector.shape_cast %77 : vector<8xf32> to vector<1x8xf32>
    %98 = vector.shape_cast %92 : vector<8xf32> to vector<1x8xf32>
    %99 = tpu.concatenate %93, %94, %95, %96, %97, %98 in 0 : vector<1x8xf32>, vector<1x8xf32>, vector<1x8xf32>, vector<1x8xf32>, vector<1x8xf32>, vector<1x8xf32> -> vector<6x8xf32>
    %c0_14 = arith.constant 0 : index
    %c0_15 = arith.constant 0 : index
    %100 = vector.load %arg1[%c0_14, %c0_15] : memref<6x8xf32, #tpu.memory_space<vmem>>, vector<6x8xf32>
    tpu.vector_store %arg1[%c0_14, %c0_15], %99 {strides = array<i32>} : memref<6x8xf32, #tpu.memory_space<vmem>>, vector<6x8xf32>,
    return
  }
}

</mosaic_0001>

<llo_original>
// kernel: tpu_custom_call.1
$region0: #{tpu_custom_call.1}
  #allocation0 [shape = 'u32[]', space=smem, size = 0x4, offset = 0x4, fixed_abs, tag = 'smem constant byte address 0x4 - core index']
  #allocation1 [shape = 'u32[144,128]{1,0:T(1,128)}', space=vmem, size = 0x12000, scoped, tag = 'internal scratch']
  %s0 = inlined_call_operand.hbm [shape: f32[4,8,32], index: 0, kind: input, shape index: {}]
  %s1 = inlined_call_operand.hbm [shape: f32[6,8], index: 1, kind: output, shape index: {}]
  %s2 = sld [smem:[#allocation0]]
  $region18: #{tpu_custom_call.1} parent=0
    _
  %s4 = ssub.s32 1, %s2
  %s5 = scalar_select 0, %s4, %s2
  $region1: #{tpu_custom_call.1} parent=0
    #allocation2 [shape = 'u8[16384]{0}', space=vmem, size = 0x4000, scoped, tag = 'input window, operand 0, single buffered']
    #allocation3 [shape = 's32[1]{0}', space=sflag, size = 0x4, scoped, tag = 'scoped memory for tpu_custom_call.1']
    #allocation4 [shape = 's32[1]{0}', space=sflag, size = 0x4, scoped, tag = 'scoped memory for tpu_custom_call.1']
    #allocation5 [shape = 'u8[4096]{0}', space=vmem, size = 0x1000, scoped, tag = 'output window, operand 0, single buffered']
    %6 = vsyncpa [#allocation3], 0
    %7 = vsyncpa [#allocation4], 0
    // Predicated region
    $region2: #{tpu_custom_call.1} parent=1 // pred_check
      _
    $region3: #{tpu_custom_call.1} parent=1 // pred_check_branch
      %9 = sbr.rel (0) target = $region5
    $region4: #{tpu_custom_call.1} parent=1 // pred_region
      %s11 = ssub.s32 512, 512
      %12 = vsyncadd [#allocation3], %s11
      %s13 = sshll.u32 [#allocation2], 4
      %s14 = int_to_ptr.vmem [resolvable:$true] %s13
      %19 = dma.hbm_to_vmem [thread:$0]  %s0, 512, %s14, [#allocation3], 128, 128, 8
    $region5: #{tpu_custom_call.1} parent=1 // pred_fallthru
      _
    // Predicated region
    $region6: #{tpu_custom_call.1} parent=1 // pred_check
      _
    $region7: #{tpu_custom_call.1} parent=1 // pred_check_branch
      %21 = sbr.rel (0) target = $region9
    $region8: #{tpu_custom_call.1} parent=1 // pred_region
      %22 = dma.done [#allocation3], 512
    $region9: #{tpu_custom_call.1} parent=1 // pred_fallthru
      _
    %v23 = vld [vmem:[#allocation2] sm:$0xff]
    %v24 = vld [vmem:[#allocation2 + $0x8] sm:$0xff]
    %v25 = vld [vmem:[#allocation2 + $0x10] sm:$0xff]
    %v26 = vld [vmem:[#allocation2 + $0x18] sm:$0xff]
    %v27 = vmul.f32 %v23, %v23
    %v28 = vmul.f32 %v24, %v24
    %v29 = vmul.f32 %v25, %v25
    %v30 = vmul.f32 %v26, %v26
    %vm31 = vcmask 261120
    %v32 = vsel %vm31, %v27, 0.0
    %33 = vadd.xlane.f32.xlu0 %v32
    %v34 = vpop.xlane.xlu0 %33
    %v35 = vsel %vm31, %v28, 0.0
    %36 = vadd.xlane.f32.xlu0 %v35
    %v37 = vpop.xlane.xlu0 %36
    %v38 = vsel %vm31, %v29, 0.0
    %39 = vadd.xlane.f32.xlu0 %v38
    %v40 = vpop.xlane.xlu0 %39
    %v41 = vsel %vm31, %v30, 0.0
    %42 = vadd.xlane.f32.xlu0 %v41
    %v43 = vpop.xlane.xlu0 %42
    %v44 = vmul.f32 %v23, %v24
    %v45 = vsel %vm31, %v44, 0.0
    %46 = vadd.xlane.f32.xlu0 %v45
    %v47 = vpop.xlane.xlu0 %46
    %v48 = vmul.f32 %v34, %v37
    %v49 = vmax.f32 %v48, 1e-18
    %v50 = vrsqrt.pop %v49
    %v51 = vmul.f32 %v47, %v50
    %v52 = vmul.f32 %v23, %v25
    %v53 = vsel %vm31, %v52, 0.0
    %54 = vadd.xlane.f32.xlu0 %v53
    %v55 = vpop.xlane.xlu0 %54
    %v56 = vmul.f32 %v34, %v40
    %v57 = vmax.f32 %v56, 1e-18
    %v58 = vrsqrt.pop %v57
    %v59 = vmul.f32 %v55, %v58
    %v60 = vmul.f32 %v23, %v26
    %v61 = vsel %vm31, %v60, 0.0
    %62 = vadd.xlane.f32.xlu0 %v61
    %v63 = vpop.xlane.xlu0 %62
    %v64 = vmul.f32 %v34, %v43
    %v65 = vmax.f32 %v64, 1e-18
    %v66 = vrsqrt.pop %v65
    %v67 = vmul.f32 %v63, %v66
    %v68 = vmul.f32 %v24, %v25
    %v69 = vsel %vm31, %v68, 0.0
    %70 = vadd.xlane.f32.xlu0 %v69
    %v71 = vpop.xlane.xlu0 %70
    %v72 = vmul.f32 %v37, %v40
    %v73 = vmax.f32 %v72, 1e-18
    %v74 = vrsqrt.pop %v73
    %v75 = vmul.f32 %v71, %v74
    %v76 = vmul.f32 %v24, %v26
    %v77 = vsel %vm31, %v76, 0.0
    %78 = vadd.xlane.f32.xlu0 %v77
    %v79 = vpop.xlane.xlu0 %78
    %v80 = vmul.f32 %v37, %v43
    %v81 = vmax.f32 %v80, 1e-18
    %v82 = vrsqrt.pop %v81
    %v83 = vmul.f32 %v79, %v82
    %v84 = vmul.f32 %v25, %v26
    %v85 = vsel %vm31, %v84, 0.0
    %86 = vadd.xlane.f32.xlu0 %v85
    %v87 = vpop.xlane.xlu0 %86
    %v88 = vmul.f32 %v40, %v43
    %v89 = vmax.f32 %v88, 1e-18
    %v90 = vrsqrt.pop %v89
    %v91 = vmul.f32 %v87, %v90
    %v93 = vlaneseq
    %v94 = vand.u32 %v93, 127
    %v95 = vlaneseq
    %v96 = vshrl.u32 %v95, 7
    %v97 = vsub.s32 %v94, %v96
    %v98 = vrot.slane %v51, %v97
    %v101 = vlaneseq
    %v102 = vshrl.u32 %v101, 7
    %v103 = vsub.s32 %v94, %v102
    %v104 = vrot.slane %v59, %v103
    %v107 = vlaneseq
    %v108 = vshrl.u32 %v107, 7
    %v109 = vsub.s32 %v94, %v108
    %v110 = vrot.slane %v67, %v109
    %v113 = vlaneseq
    %v114 = vshrl.u32 %v113, 7
    %v115 = vsub.s32 %v94, %v114
    %v116 = vrot.slane %v75, %v115
    %v119 = vlaneseq
    %v120 = vshrl.u32 %v119, 7
    %v121 = vsub.s32 %v94, %v120
    %v122 = vrot.slane %v83, %v121
    %v125 = vlaneseq
    %v126 = vshrl.u32 %v125, 7
    %v127 = vsub.s32 %v94, %v126
    %v128 = vrot.slane %v91, %v127
    %vm130 = vcmask 1040384
    %v131 = vsel %vm130, %v98, %v104
    %vm132 = vcmask 1041408
    %v133 = vsel %vm132, %v131, %v110
    %vm134 = vcmask 1042432
    %v135 = vsel %vm134, %v133, %v116
    %vm136 = vcmask 1043456
    %v137 = vsel %vm136, %v135, %v122
    %vm138 = vcmask 1044480
    %v139 = vsel %vm138, %v137, %v128
    %vm140 = vcmask 62464
    %141 = vst.msk [vmem:[#allocation5] sm:$0x3f] %vm140, %v139
    // Predicated region
    $region10: #{tpu_custom_call.1} parent=1 // pred_check
      _
    $region11: #{tpu_custom_call.1} parent=1 // pred_check_branch
      %143 = sbr.rel (0) target = $region13
    $region12: #{tpu_custom_call.1} parent=1 // pred_region
      %s145 = ssub.s32 128, 128
      %146 = vsyncadd [#allocation4], %s145
      %s148 = sshll.u32 [#allocation5], 4
      %s149 = int_to_ptr.vmem [resolvable:$true] %s148
      %151 = dma.vmem_to_hbm [thread:$0]  %s149, 128, %s1, [#allocation4]
    $region13: #{tpu_custom_call.1} parent=1 // pred_fallthru
      _
    // Predicated region
    $region14: #{tpu_custom_call.1} parent=1 // pred_check
      _
    $region15: #{tpu_custom_call.1} parent=1 // pred_check_branch
      %153 = sbr.rel (0) target = $region17
    $region16: #{tpu_custom_call.1} parent=1 // pred_region
      %154 = dma.done [#allocation4], 128
    $region17: #{tpu_custom_call.1} parent=1 // pred_fallthru
      _
    %155 = vsyncpa [#allocation3], 1
    %156 = vsyncpa [#allocation4], 1

</llo_original>
